<compile_context>
chip_gen: v6e
topology: v6e:2x2x1
jax: 0.10.0
libtpu: 0.0.40
codegen_flags: <defaults>
</compile_context>

<pallas_src>
import functools

import jax
import jax.numpy as jnp
from jax import lax
from jax.experimental import pallas as pl
from jax.experimental.pallas import tpu as pltpu

_LN_EPS = 1e-5  # PyTorch nn.LayerNorm default


def _round_up(v, m):
    return ((v + m - 1) // m) * m


def _layer_norm_f32(h, gamma, beta):
    """Row-wise LayerNorm over the last dim, all in f32 (VPU + EUP rsqrt)."""
    mean = jnp.mean(h, axis=-1, keepdims=True)
    centered = h - mean
    var = jnp.mean(centered * centered, axis=-1, keepdims=True)
    inv = lax.rsqrt(var + _LN_EPS)            # EUP slot
    return centered * inv * gamma + beta


def _traj_embed_kernel(x_ref, w1_ref, v1_ref, w2_ref, v2_ref, o_ref, *, mxu_dtype):
    """One grid step = `rb` flattened (zero-padded) trajectories.

    x_ref : (rb, Din_pad)  VMEM  mxu_dtype
    w1_ref: (Din_pad, 2E)  VMEM  mxu_dtype
    v1_ref: (3, 2E)        VMEM  f32   rows = [b1, gamma1, beta1]
    w2_ref: (2E, E)        VMEM  mxu_dtype
    v2_ref: (3, E)         VMEM  f32   rows = [b2, gamma2, beta2]
    o_ref : (rb, E)        VMEM
    """
    # ---- Linear 1 (MXU, f32 accumulate) + bias + ReLU ----
    h = jnp.dot(x_ref[...], w1_ref[...], preferred_element_type=jnp.float32)
    h = jnp.maximum(h + v1_ref[0], 0.0)

    # ---- LayerNorm 1 (f32 VPU/EUP) ----
    h = _layer_norm_f32(h, v1_ref[1], v1_ref[2])

    # ---- Linear 2 (MXU) + bias ----
    # bf16 path: LN1 output re-quantized to bf16 here (source of the ~5e-2 tol).
    y = jnp.dot(h.astype(mxu_dtype), w2_ref[...], preferred_element_type=jnp.float32)
    y = y + v2_ref[0]

    # ---- LayerNorm 2 (f32) ----
    y = _layer_norm_f32(y, v2_ref[1], v2_ref[2])

    o_ref[...] = y.astype(o_ref.dtype)


def trajectory_embedding(trajectories, params, indices=None, *,
                         row_block=512, mxu_dtype=jnp.bfloat16,
                         out_dtype=jnp.float32):
    """trajectories: (N, T, D) f32.  params: (w1,b1,g1,be1,w2,b2,g2,be2) with
    w1: (T*D, 2E), w2: (2E, E) (PyTorch Linear weights pre-transposed to (in, out))."""
    w1, b1, g1, be1, w2, b2, g2, be2 = params
    N, T, D = trajectories.shape
    din = T * D
    H2 = w1.shape[1]
    E = w2.shape[1]

    # --- gather + flatten (wrapper-side layout plumbing only) ---
    if indices is None:
        x = trajectories.reshape(N, din)
    else:
        x = jnp.take(trajectories, indices, axis=0).reshape(indices.shape[0], din)
    M = x.shape[0]

    # --- lane-dense contraction dim: pad T*D up to a multiple of 128 ---
    din_pad = max(128, _round_up(din, 128))

    # Sublane packing of the MXU-operand dtype (f32 -> 8 rows, bf16 -> 16 rows).
    itemsize = jnp.dtype(mxu_dtype).itemsize
    sublane = 8 * (4 // itemsize)

    # --- row blocking: minimal row padding, >=2 grid steps when possible (v7x) ---
    M_aligned = _round_up(M, sublane)
    if M_aligned >= 2 * sublane:
        rb_cap = _round_up(pl.cdiv(M_aligned, 2), sublane)
    else:
        rb_cap = M_aligned
    rb = min(_round_up(row_block, sublane), rb_cap)
    M_pad = pl.cdiv(M_aligned, rb) * rb

    # Cast MXU operands once in the wrapper; zero-pad rows/cols (exact matmul,
    # padded rows are finite through LN and sliced off).
    x = jnp.pad(x.astype(mxu_dtype), ((0, M_pad - M), (0, din_pad - din)))
    w1p = jnp.pad(w1, ((0, din_pad - din), (0, 0))).astype(mxu_dtype)
    w2c = w2.astype(mxu_dtype)
    v1 = jnp.stack([b1, g1, be1]).astype(jnp.float32)   # (3, 2E)
    v2 = jnp.stack([b2, g2, be2]).astype(jnp.float32)   # (3, E)

    kernel = functools.partial(_traj_embed_kernel, mxu_dtype=mxu_dtype)

    out = pl.pallas_call(
        kernel,
        out_shape=jax.ShapeDtypeStruct((M_pad, E), out_dtype),
        grid_spec=pltpu.PrefetchScalarGridSpec(
            num_scalar_prefetch=0,
            grid=(M_pad // rb,),
            in_specs=[
                pl.BlockSpec((rb, din_pad), lambda i: (i, 0)),   # x rows (blocked)
                pl.BlockSpec((din_pad, H2), lambda i: (0, 0)),   # W1 (resident)
                pl.BlockSpec((3, H2), lambda i: (0, 0)),         # [b1, gamma1, beta1]
                pl.BlockSpec((H2, E), lambda i: (0, 0)),         # W2 (resident)
                pl.BlockSpec((3, E), lambda i: (0, 0)),          # [b2, gamma2, beta2]
            ],
            out_specs=pl.BlockSpec((rb, E), lambda i: (i, 0)),
        ),
        compiler_params=pltpu.CompilerParams(
            dimension_semantics=("parallel",)),
        cost_estimate=pl.CostEstimate(
            flops=2 * M_pad * (din_pad * H2 + H2 * E),
            transcendentals=2 * M_pad,                  # one rsqrt per row per LN
            bytes_accessed=(M_pad * din_pad * itemsize          # x
                            + din_pad * H2 * itemsize           # W1
                            + H2 * E * itemsize                 # W2
                            + 3 * (H2 + E) * 4                  # packed vectors
                            + M_pad * E * jnp.dtype(out_dtype).itemsize),
        ),
    )(x, w1p, v1, w2c, v2)

    return out[:M]


def _reference(trajectories, params, indices=None):
    """Pure-JAX reference mirroring the PyTorch forward (eval mode)."""
    w1, b1, g1, be1, w2, b2, g2, be2 = params
    if indices is None:
        x = trajectories.reshape(trajectories.shape[0], -1)
    else:
        x = trajectories[indices].reshape(indices.shape[0], -1)

    def ln(h, gamma, beta):
        mean = jnp.mean(h, axis=-1, keepdims=True)
        var = jnp.mean((h - mean) ** 2, axis=-1, keepdims=True)
        return (h - mean) / jnp.sqrt(var + _LN_EPS) * gamma + beta

    h = jnp.maximum(x @ w1 + b1, 0.0)
    h = ln(h, g1, be1)
    y = h @ w2 + b2
    return ln(y, g2, be2)


if __name__ == "__main__":
    # Small shapes consistent with the module: trajectories (N, T, D), embed_dim E.
    # Lane-dense choice: E = 128 -> hidden = 256; T*D = 32 is padded to 128 in-wrapper.
    N_TRAJ, T, D = 64, 8, 4
    E = 128
    H2 = 2 * E

    key = jax.random.PRNGKey(0)
    kt, kw1, kb1, kw2, kb2, kg1, kg2 = jax.random.split(key, 7)

    trajectories = jax.random.normal(kt, (N_TRAJ, T, D), dtype=jnp.float32)

    # nn.Linear weights pre-transposed to (in, out); LN affine params.
    w1 = jax.random.normal(kw1, (T * D, H2), dtype=jnp.float32) * 0.05
    b1 = jax.random.normal(kb1, (H2,), dtype=jnp.float32) * 0.05
    g1 = 1.0 + 0.1 * jax.random.normal(kg1, (H2,), dtype=jnp.float32)
    be1 = jnp.zeros((H2,), dtype=jnp.float32)
    w2 = jax.random.normal(kw2, (H2, E), dtype=jnp.float32) * 0.05
    b2 = jax.random.normal(kb2, (E,), dtype=jnp.float32) * 0.05
    g2 = 1.0 + 0.1 * jax.random.normal(kg2, (E,), dtype=jnp.float32)
    be2 = jnp.zeros((E,), dtype=jnp.float32)
    params = (w1, b1, g1, be1, w2, b2, g2, be2)

    ref_all = _reference(trajectories, params)

    # --- default path: bf16 MXU operands, rows split into 2 parallel grid steps ---
    out_bf16 = jax.block_until_ready(trajectory_embedding(trajectories, params))
    assert out_bf16.shape == (N_TRAJ, E)
    assert jnp.allclose(out_bf16, ref_all, atol=5e-2, rtol=5e-2), "mismatch (bf16 path)"

    # --- exact f32 MXU-operand path ---
    out_f32 = jax.block_until_ready(
        trajectory_embedding(trajectories, params, mxu_dtype=jnp.float32))
    assert jnp.allclose(out_f32, ref_all, atol=1e-4, rtol=1e-4), "mismatch (f32 path)"

    # --- forward(indices): gather in wrapper, rows padded only to 16 (not 128) ---
    indices = jnp.array([3, 17, 42, 0, 63, 7, 21, 9, 55, 30], dtype=jnp.int32)
    out_sel = jax.block_until_ready(trajectory_embedding(trajectories, params, indices))
    ref_sel = _reference(trajectories, params, indices)
    assert out_sel.shape == (indices.shape[0], E)
    assert jnp.allclose(out_sel, ref_sel, atol=5e-2, rtol=5e-2), "mismatch (indices path)"

    print("KERNEL_OK")
</pallas_src>

<mosaic_0001>
module attributes {stable_mosaic.version = 11 : i64} {
  func.func @_traj_embed_kernel(%arg0: i32, %arg1: memref<32x128xbf16, #tpu.memory_space<vmem>>, %arg2: memref<128x256xbf16, #tpu.memory_space<vmem>>, %arg3: memref<3x256xf32, #tpu.memory_space<vmem>>, %arg4: memref<256x128xbf16, #tpu.memory_space<vmem>>, %arg5: memref<3x128xf32, #tpu.memory_space<vmem>>, %arg6: memref<32x128xf32, #tpu.memory_space<vmem>>) attributes {dimension_semantics = [#tpu.dimension_semantics<parallel>], iteration_bounds = array<i64: 2>, scalar_prefetch = 0 : i64, scratch_operands = 0 : i64, tpu.core_type = #tpu.core_type<tc>, window_params = [{transform_indices = @transform_0, window_bounds = array<i64: 32, 128>}, {pipeline_mode = #tpu.pipeline_mode<synchronous>, transform_indices = @transform_1, window_bounds = array<i64: 128, 256>}, {pipeline_mode = #tpu.pipeline_mode<synchronous>, transform_indices = @transform_2, window_bounds = array<i64: 3, 256>}, {pipeline_mode = #tpu.pipeline_mode<synchronous>, transform_indices = @transform_3, window_bounds = array<i64: 256, 128>}, {pipeline_mode = #tpu.pipeline_mode<synchronous>, transform_indices = @transform_4, window_bounds = array<i64: 3, 128>}, {transform_indices = @transform_5, window_bounds = array<i64: 32, 128>}]} {
    %c0 = arith.constant 0 : index
    %c0_0 = arith.constant 0 : index
    %0 = vector.load %arg1[%c0, %c0_0] : memref<32x128xbf16, #tpu.memory_space<vmem>>, vector<32x128xbf16>
    %c0_1 = arith.constant 0 : index
    %c0_2 = arith.constant 0 : index
    %1 = vector.load %arg2[%c0_1, %c0_2] : memref<128x256xbf16, #tpu.memory_space<vmem>>, vector<128x256xbf16>
    %cst = arith.constant dense<0.000000e+00> : vector<32x256xf32>
    %2 = tpu.matmul %0, %1, %cst {dimension_numbers = #tpu.dot_dimension_numbers<[1], [0], [0], [1], [0, 0, 1, 1], [], []>} : vector<32x128xbf16>, vector<128x256xbf16>, vector<32x256xf32> -> vector<32x256xf32>
    %c0_3 = arith.constant 0 : index
    %c0_4 = arith.constant 0 : index
    %3 = vector.load %arg3[%c0_3, %c0_4] : memref<3x256xf32, #tpu.memory_space<vmem>>, vector<1x256xf32>
    %4 = vector.shape_cast %3 : vector<1x256xf32> to vector<256xf32>
    %5 = vector.shape_cast %4 : vector<256xf32> to vector<1x256xf32>
    %6 = vector.broadcast %5 : vector<1x256xf32> to vector<32x256xf32>
    %7 = arith.addf %2, %6 : vector<32x256xf32>
    %cst_5 = arith.constant 0.000000e+00 : f32
    %8 = vector.broadcast %cst_5 : f32 to vector<32x256xf32>
    %9 = arith.maximumf %7, %8 : vector<32x256xf32>
    %c1 = arith.constant 1 : index
    %c0_6 = arith.constant 0 : index
    %10 = vector.load %arg3[%c1, %c0_6] : memref<3x256xf32, #tpu.memory_space<vmem>>, vector<1x256xf32>
    %11 = vector.shape_cast %10 : vector<1x256xf32> to vector<256xf32>
    %c2 = arith.constant 2 : index
    %c0_7 = arith.constant 0 : index
    %12 = vector.load %arg3[%c2, %c0_7] : memref<3x256xf32, #tpu.memory_space<vmem>>, vector<1x256xf32>
    %13 = vector.shape_cast %12 : vector<1x256xf32> to vector<256xf32>
    %cst_8 = arith.constant dense<0.000000e+00> : vector<32xf32>
    %14 = vector.multi_reduction <add>, %9, %cst_8 [1] : vector<32x256xf32> to vector<32xf32>
    %15 = vector.shape_cast %14 : vector<32xf32> to vector<32x1xf32>
    %cst_9 = arith.constant 2.560000e+02 : f32
    %16 = vector.broadcast %cst_9 : f32 to vector<32x1xf32>
    %17 = arith.divf %15, %16 : vector<32x1xf32>
    %18 = vector.broadcast %17 : vector<32x1xf32> to vector<32x256xf32>
    %19 = arith.subf %9, %18 : vector<32x256xf32>
    %20 = arith.mulf %19, %19 : vector<32x256xf32>
    %cst_10 = arith.constant dense<0.000000e+00> : vector<32xf32>
    %21 = vector.multi_reduction <add>, %20, %cst_10 [1] : vector<32x256xf32> to vector<32xf32>
    %22 = vector.shape_cast %21 : vector<32xf32> to vector<32x1xf32>
    %cst_11 = arith.constant 2.560000e+02 : f32
    %23 = vector.broadcast %cst_11 : f32 to vector<32x1xf32>
    %24 = arith.divf %22, %23 : vector<32x1xf32>
    %cst_12 = arith.constant 9.99999974E-6 : f32
    %25 = vector.broadcast %cst_12 : f32 to vector<32x1xf32>
    %26 = arith.addf %24, %25 : vector<32x1xf32>
    %27 = math.rsqrt %26 : vector<32x1xf32>
    %28 = vector.broadcast %27 : vector<32x1xf32> to vector<32x256xf32>
    %29 = arith.mulf %19, %28 : vector<32x256xf32>
    %30 = vector.shape_cast %11 : vector<256xf32> to vector<1x256xf32>
    %31 = vector.broadcast %30 : vector<1x256xf32> to vector<32x256xf32>
    %32 = arith.mulf %29, %31 : vector<32x256xf32>
    %33 = vector.shape_cast %13 : vector<256xf32> to vector<1x256xf32>
    %34 = vector.broadcast %33 : vector<1x256xf32> to vector<32x256xf32>
    %35 = arith.addf %32, %34 : vector<32x256xf32>
    %36 = arith.truncf %35 : vector<32x256xf32> to vector<32x256xbf16>
    %c0_13 = arith.constant 0 : index
    %c0_14 = arith.constant 0 : index
    %37 = vector.load %arg4[%c0_13, %c0_14] : memref<256x128xbf16, #tpu.memory_space<vmem>>, vector<256x128xbf16>
    %cst_15 = arith.constant dense<0.000000e+00> : vector<32x128xf32>
    %38 = tpu.matmul %36, %37, %cst_15 {dimension_numbers = #tpu.dot_dimension_numbers<[1], [0], [0], [1], [0, 0, 1, 1], [], []>} : vector<32x256xbf16>, vector<256x128xbf16>, vector<32x128xf32> -> vector<32x128xf32>
    %c0_16 = arith.constant 0 : index
    %c0_17 = arith.constant 0 : index
    %39 = vector.load %arg5[%c0_16, %c0_17] : memref<3x128xf32, #tpu.memory_space<vmem>>, vector<1x128xf32>
    %40 = vector.shape_cast %39 : vector<1x128xf32> to vector<128xf32>
    %41 = vector.shape_cast %40 : vector<128xf32> to vector<1x128xf32>
    %42 = vector.broadcast %41 : vector<1x128xf32> to vector<32x128xf32>
    %43 = arith.addf %38, %42 : vector<32x128xf32>
    %c1_18 = arith.constant 1 : index
    %c0_19 = arith.constant 0 : index
    %44 = vector.load %arg5[%c1_18, %c0_19] : memref<3x128xf32, #tpu.memory_space<vmem>>, vector<1x128xf32>
    %45 = vector.shape_cast %44 : vector<1x128xf32> to vector<128xf32>
    %c2_20 = arith.constant 2 : index
    %c0_21 = arith.constant 0 : index
    %46 = vector.load %arg5[%c2_20, %c0_21] : memref<3x128xf32, #tpu.memory_space<vmem>>, vector<1x128xf32>
    %47 = vector.shape_cast %46 : vector<1x128xf32> to vector<128xf32>
    %cst_22 = arith.constant dense<0.000000e+00> : vector<32xf32>
    %48 = vector.multi_reduction <add>, %43, %cst_22 [1] : vector<32x128xf32> to vector<32xf32>
    %49 = vector.shape_cast %48 : vector<32xf32> to vector<32x1xf32>
    %cst_23 = arith.constant 1.280000e+02 : f32
    %50 = vector.broadcast %cst_23 : f32 to vector<32x1xf32>
    %51 = arith.divf %49, %50 : vector<32x1xf32>
    %52 = vector.broadcast %51 : vector<32x1xf32> to vector<32x128xf32>
    %53 = arith.subf %43, %52 : vector<32x128xf32>
    %54 = arith.mulf %53, %53 : vector<32x128xf32>
    %cst_24 = arith.constant dense<0.000000e+00> : vector<32xf32>
    %55 = vector.multi_reduction <add>, %54, %cst_24 [1] : vector<32x128xf32> to vector<32xf32>
    %56 = vector.shape_cast %55 : vector<32xf32> to vector<32x1xf32>
    %cst_25 = arith.constant 1.280000e+02 : f32
    %57 = vector.broadcast %cst_25 : f32 to vector<32x1xf32>
    %58 = arith.divf %56, %57 : vector<32x1xf32>
    %cst_26 = arith.constant 9.99999974E-6 : f32
    %59 = vector.broadcast %cst_26 : f32 to vector<32x1xf32>
    %60 = arith.addf %58, %59 : vector<32x1xf32>
    %61 = math.rsqrt %60 : vector<32x1xf32>
    %62 = vector.broadcast %61 : vector<32x1xf32> to vector<32x128xf32>
    %63 = arith.mulf %53, %62 : vector<32x128xf32>
    %64 = vector.shape_cast %45 : vector<128xf32> to vector<1x128xf32>
    %65 = vector.broadcast %64 : vector<1x128xf32> to vector<32x128xf32>
    %66 = arith.mulf %63, %65 : vector<32x128xf32>
    %67 = vector.shape_cast %47 : vector<128xf32> to vector<1x128xf32>
    %68 = vector.broadcast %67 : vector<1x128xf32> to vector<32x128xf32>
    %69 = arith.addf %66, %68 : vector<32x128xf32>
    %c0_27 = arith.constant 0 : index
    %c0_28 = arith.constant 0 : index
    %70 = vector.load %arg6[%c0_27, %c0_28] : memref<32x128xf32, #tpu.memory_space<vmem>>, vector<32x128xf32>
    tpu.vector_store %arg6[%c0_27, %c0_28], %69 {strides = array<i32>} : memref<32x128xf32, #tpu.memory_space<vmem>>, vector<32x128xf32>,
    return
  }
  func.func @transform_0(%arg0: i32) -> (i32, i32) {
    %c0_i32 = arith.constant 0 : i32
    %c0_i32_0 = arith.constant 0 : i32
    return %arg0, %c0_i32 : i32, i32
  }
  func.func @transform_1(%arg0: i32) -> (i32, i32) {
    %c0_i32 = arith.constant 0 : i32
    %c0_i32_0 = arith.constant 0 : i32
    %c0_i32_1 = arith.constant 0 : i32
    return %c0_i32, %c0_i32_0 : i32, i32
  }
  func.func @transform_2(%arg0: i32) -> (i32, i32) {
    %c0_i32 = arith.constant 0 : i32
    %c0_i32_0 = arith.constant 0 : i32
    %c0_i32_1 = arith.constant 0 : i32
    return %c0_i32, %c0_i32_0 : i32, i32
  }
  func.func @transform_3(%arg0: i32) -> (i32, i32) {
    %c0_i32 = arith.constant 0 : i32
    %c0_i32_0 = arith.constant 0 : i32
    %c0_i32_1 = arith.constant 0 : i32
    return %c0_i32, %c0_i32_0 : i32, i32
  }
  func.func @transform_4(%arg0: i32) -> (i32, i32) {
    %c0_i32 = arith.constant 0 : i32
    %c0_i32_0 = arith.constant 0 : i32
    %c0_i32_1 = arith.constant 0 : i32
    return %c0_i32, %c0_i32_0 : i32, i32
  }
  func.func @transform_5(%arg0: i32) -> (i32, i32) {
    %c0_i32 = arith.constant 0 : i32
    %c0_i32_0 = arith.constant 0 : i32
    return %arg0, %c0_i32 : i32, i32
  }
}

</mosaic_0001>

<llo_original>
// kernel: tpu_custom_call.1
$region0: #{tpu_custom_call.1}
  #allocation0 [shape = 'u32[]', space=smem, size = 0x4, offset = 0x4, fixed_abs, tag = 'smem constant byte address 0x4 - core index']
  #allocation1 [shape = 'u32[144,128]{1,0:T(1,128)}', space=vmem, size = 0x12000, scoped, tag = 'internal scratch']
  %s0 = inlined_call_operand.hbm [shape: bf16[64,128], index: 0, kind: input, shape index: {}]
  %s1 = inlined_call_operand.hbm [shape: bf16[128,256], index: 1, kind: input, shape index: {}]
  %s2 = inlined_call_operand.hbm [shape: f32[3,256], index: 2, kind: input, shape index: {}]
  %s3 = inlined_call_operand.hbm [shape: bf16[256,128], index: 3, kind: input, shape index: {}]
  %s4 = inlined_call_operand.vmem [shape: f32[3,128], index: 4, kind: input, shape index: {}]
  %s5 = inlined_call_operand.hbm [shape: f32[64,128], index: 5, kind: output, shape index: {}]
  %s6 = sld [smem:[#allocation0]]
  $region69: #{tpu_custom_call.1} parent=0
    _
  %s8 = ssub.s32 1, %s6
  %s9 = scalar_select 0, %s8, %s6
  $region1: #{tpu_custom_call.1} parent=0
    #allocation2 [shape = 'u8[16384]{0}', space=vmem, size = 0x4000, scoped, tag = 'input window, operand 0']
    #allocation3 [shape = 's32[2]{0}', space=sflag, size = 0x8, scoped, tag = 'scoped memory for tpu_custom_call.1']
    #allocation4 [shape = 's32[2]{0}', space=sflag, size = 0x8, scoped, tag = 'scoped memory for tpu_custom_call.1']
    #allocation5 [shape = 'u8[65536]{0}', space=vmem, size = 0x10000, scoped, tag = 'input window, operand 1, single buffered']
    #allocation6 [shape = 's32[1]{0}', space=sflag, size = 0x4, scoped, tag = 'scoped memory for tpu_custom_call.1']
    #allocation7 [shape = 'u8[4096]{0}', space=vmem, size = 0x1000, scoped, tag = 'input window, operand 2, single buffered']
    #allocation8 [shape = 'u8[65536]{0}', space=vmem, size = 0x10000, scoped, tag = 'input window, operand 3, single buffered']
    #allocation9 [shape = 's32[1]{0}', space=sflag, size = 0x4, scoped, tag = 'scoped memory for tpu_custom_call.1']
    #allocation10 [shape = 'u8[32768]{0}', space=vmem, size = 0x8000, scoped, tag = 'output window, operand 0']
    %10 = vsyncpa [#allocation3], 0
    %s11 = scalar_lea.sflag [#allocation3], 1
    %12 = vsyncpa %s11, 0
    %13 = vsyncpa [#allocation6], 0
    %14 = vsyncpa [#allocation9], 0
    %15 = vsyncpa [#allocation4], 0
    %s16 = scalar_lea.sflag [#allocation4], 1
    %17 = vsyncpa %s16, 0
    loop: start=0, step=1, limit=4
    $region2: #{tpu_custom_call.1} parent=1 // loop_pre_header
      _
    $region3: #{tpu_custom_call.1} parent=1 // loop_header
      %s19 = sphi 0, %s23
      %p20 = scmp.ge.s32.totalorder %s19, 4
      %s29 = sphi 0, %s31
      %s32 = sphi 0, %s29
      %s33 = sphi 0, %s32
      %s49 = sphi 0, %s33
      %s53 = sphi 0, %s53
      %s55 = sphi 0, %s53
      %s56 = sphi 0, %s55
      %s70 = sphi 0, %s56
      %s74 = sphi 0, %s74
      %s76 = sphi 0, %s74
      %s77 = sphi 0, %s76
      %s91 = sphi 0, %s77
      %s95 = sphi 0, %s95
      %s97 = sphi 0, %s95
      %s98 = sphi 0, %s97
      %s112 = sphi 0, %s98
      %s116 = sphi 0, %s116
      %s118 = sphi 0, %s116
      %s119 = sphi 0, %s118
      %s133 = sphi 0, %s119
      %s139 = sphi 0, %s141
      %s142 = sphi 0, %s139
      %s143 = sphi 0, %s142
      %s159 = sphi 0, %s143
    $region4: #{tpu_custom_call.1} parent=1 // loop_header_branch
      %22 = sbr.rel (%p20) target = $region8
    $region5: #{tpu_custom_call.1} parent=1 // loop_body
      %s24 = ssub.s32 %s19, 1
      %s25 = ssub.s32 %s19, 2
      %s26 = sadd.s32 %s19, 1
      %s27 = ssub.s32 %s19, %s26
      %p28 = scmp.eq.s32.totalorder %s27, 0
      %s30 = sadd.s32 %s29, 1
      %s31 = scalar_select %p28, %s29, %s30
      %p34 = pneg %p28
      %p35 = scmp.eq.s32.totalorder %s19, 1
      %p36 = por %p34, %p35
      %p37 = scmp.ne.s32.totalorder %s29, %s32
      %p38 = scmp.eq.s32.totalorder %s19, 0
      %p39 = por %p37, %p38
      %p40 = scmp.ne.s32.totalorder %s29, %s32
      %p41 = scmp.eq.s32.totalorder %s24, 1
      %p42 = por %p40, %p41
      %p43 = scmp.ne.s32.totalorder %s32, %s33
      %p44 = scmp.eq.s32.totalorder %s24, 0
      %p45 = por %p43, %p44
      %p46 = scmp.ne.s32.totalorder %s32, %s33
      %p47 = scmp.eq.s32.totalorder %s25, 1
      %p48 = por %p46, %p47
      %p50 = scmp.ne.s32.totalorder %s33, %s49
      %p51 = scmp.eq.s32.totalorder %s25, 0
      %p52 = por %p50, %p51
      %s54 = sadd.s32 %s53, 1
      %p57 = scmp.eq.s32.totalorder %s19, 1
      %p58 = scmp.ne.s32.totalorder %s53, %s55
      %p59 = scmp.eq.s32.totalorder %s19, 0
      %p60 = por %p58, %p59
      %p61 = scmp.ne.s32.totalorder %s53, %s55
      %p62 = scmp.eq.s32.totalorder %s24, 1
      %p63 = por %p61, %p62
      %p64 = scmp.ne.s32.totalorder %s55, %s56
      %p65 = scmp.eq.s32.totalorder %s24, 0
      %p66 = por %p64, %p65
      %p67 = scmp.ne.s32.totalorder %s55, %s56
      %p68 = scmp.eq.s32.totalorder %s25, 1
      %p69 = por %p67, %p68
      %p71 = scmp.ne.s32.totalorder %s56, %s70
      %p72 = scmp.eq.s32.totalorder %s25, 0
      %p73 = por %p71, %p72
      %s75 = sadd.s32 %s74, 1
      %p78 = scmp.eq.s32.totalorder %s19, 1
      %p79 = scmp.ne.s32.totalorder %s74, %s76
      %p80 = scmp.eq.s32.totalorder %s19, 0
      %p81 = por %p79, %p80
      %p82 = scmp.ne.s32.totalorder %s74, %s76
      %p83 = scmp.eq.s32.totalorder %s24, 1
      %p84 = por %p82, %p83
      %p85 = scmp.ne.s32.totalorder %s76, %s77
      %p86 = scmp.eq.s32.totalorder %s24, 0
      %p87 = por %p85, %p86
      %p88 = scmp.ne.s32.totalorder %s76, %s77
      %p89 = scmp.eq.s32.totalorder %s25, 1
      %p90 = por %p88, %p89
      %p92 = scmp.ne.s32.totalorder %s77, %s91
      %p93 = scmp.eq.s32.totalorder %s25, 0
      %p94 = por %p92, %p93
      %s96 = sadd.s32 %s95, 1
      %p99 = scmp.eq.s32.totalorder %s19, 1
      %p100 = scmp.ne.s32.totalorder %s95, %s97
      %p101 = scmp.eq.s32.totalorder %s19, 0
      %p102 = por %p100, %p101
      %p103 = scmp.ne.s32.totalorder %s95, %s97
      %p104 = scmp.eq.s32.totalorder %s24, 1
      %p105 = por %p103, %p104
      %p106 = scmp.ne.s32.totalorder %s97, %s98
      %p107 = scmp.eq.s32.totalorder %s24, 0
      %p108 = por %p106, %p107
      %p109 = scmp.ne.s32.totalorder %s97, %s98
      %p110 = scmp.eq.s32.totalorder %s25, 1
      %p111 = por %p109, %p110
      %p113 = scmp.ne.s32.totalorder %s98, %s112
      %p114 = scmp.eq.s32.totalorder %s25, 0
      %p115 = por %p113, %p114
      %s117 = sadd.s32 %s116, 1
      %p120 = scmp.eq.s32.totalorder %s19, 1
      %p121 = scmp.ne.s32.totalorder %s116, %s118
      %p122 = scmp.eq.s32.totalorder %s19, 0
      %p123 = por %p121, %p122
      %p124 = scmp.ne.s32.totalorder %s116, %s118
      %p125 = scmp.eq.s32.totalorder %s24, 1
      %p126 = por %p124, %p125
      %p127 = scmp.ne.s32.totalorder %s118, %s119
      %p128 = scmp.eq.s32.totalorder %s24, 0
      %p129 = por %p127, %p128
      %p130 = scmp.ne.s32.totalorder %s118, %s119
      %p131 = scmp.eq.s32.totalorder %s25, 1
      %p132 = por %p130, %p131
      %p134 = scmp.ne.s32.totalorder %s119, %s133
      %p135 = scmp.eq.s32.totalorder %s25, 0
      %p136 = por %p134, %p135
      %s137 = ssub.s32 %s19, %s26
      %p138 = scmp.eq.s32.totalorder %s137, 0
      %s140 = sadd.s32 %s139, 1
      %s141 = scalar_select %p138, %s139, %s140
      %p144 = pneg %p138
      %p145 = scmp.eq.s32.totalorder %s19, 1
      %p146 = por %p144, %p145
      %p147 = scmp.ne.s32.totalorder %s139, %s142
      %p148 = scmp.eq.s32.totalorder %s19, 0
      %p149 = por %p147, %p148
      %p150 = scmp.ne.s32.totalorder %s139, %s142
      %p151 = scmp.eq.s32.totalorder %s24, 1
      %p152 = por %p150, %p151
      %p153 = scmp.ne.s32.totalorder %s142, %s143
      %p154 = scmp.eq.s32.totalorder %s24, 0
      %p155 = por %p153, %p154
      %p156 = scmp.ne.s32.totalorder %s142, %s143
      %p157 = scmp.eq.s32.totalorder %s25, 1
      %p158 = por %p156, %p157
      %p160 = scmp.ne.s32.totalorder %s143, %s159
      %p161 = scmp.eq.s32.totalorder %s25, 0
      %p162 = por %p160, %p161
      %p163 = scmp.le.s32.totalorder 1, %s19
      %p164 = scmp.lt.s32.totalorder %s19, 3
      %p165 = pnand %p163, %p164
      %p166 = pneg %p165
      // Predicated region
      $region9: #{tpu_custom_call.1} parent=5 // pred_check
        _
      $region10: #{tpu_custom_call.1} parent=5 // pred_check_branch
        %168 = sbr.rel (%p165) target = $region12
      $region11: #{tpu_custom_call.1} parent=5 // pred_region
        %s169 = ssub.s32 %s19, 1
        // Predicated region
        $region13: #{tpu_custom_call.1} parent=11 // pred_check
          %p170 = pneg %p66
        $region14: #{tpu_custom_call.1} parent=11 // pred_check_branch
          %172 = sbr.rel (%p170) target = $region16
        $region15: #{tpu_custom_call.1} parent=11 // pred_region
          %s174 = ssub.s32 2048, 2048
          %175 = vsyncadd [#allocation6], %s174
          %s176 = sshll.u32 [#allocation5], 4
          %s177 = int_to_ptr.vmem [resolvable:$true] %s176
          %182 = dma.hbm_to_vmem [thread:$0]  %s1, 2048, %s177, [#allocation6], 128, 128, 8
        $region16: #{tpu_custom_call.1} parent=11 // pred_fallthru
          _
        // Predicated region
        $region17: #{tpu_custom_call.1} parent=11 // pred_check
          %p183 = pneg %p87
        $region18: #{tpu_custom_call.1} parent=11 // pred_check_branch
          %185 = sbr.rel (%p183) target = $region20
        $region19: #{tpu_custom_call.1} parent=11 // pred_region
          %s187 = ssub.s32 128, 128
          %188 = vsyncadd [#allocation6], %s187
          %s190 = sshll.u32 [#allocation7], 4
          %s191 = int_to_ptr.vmem [resolvable:$true] %s190
          %193 = dma.hbm_to_vmem [thread:$0]  %s2, 128, %s191, [#allocation6]
        $region20: #{tpu_custom_call.1} parent=11 // pred_fallthru
          _
        // Predicated region
        $region21: #{tpu_custom_call.1} parent=11 // pred_check
          %p194 = pneg %p108
        $region22: #{tpu_custom_call.1} parent=11 // pred_check_branch
          %196 = sbr.rel (%p194) target = $region24
        $region23: #{tpu_custom_call.1} parent=11 // pred_region
          %s198 = ssub.s32 2048, 2048
          %199 = vsyncadd [#allocation9], %s198
          %s200 = sshll.u32 [#allocation8], 4
          %s201 = int_to_ptr.vmem [resolvable:$true] %s200
          %206 = dma.hbm_to_vmem [thread:$0]  %s3, 2048, %s201, [#allocation9], 64, 64, 4
        $region24: #{tpu_custom_call.1} parent=11 // pred_fallthru
          _
        // Predicated region
        $region25: #{tpu_custom_call.1} parent=11 // pred_check
          %p207 = pneg %p129
        $region26: #{tpu_custom_call.1} parent=11 // pred_check_branch
          %209 = sbr.rel (%p207) target = $region28
        $region27: #{tpu_custom_call.1} parent=11 // pred_region
          _
        $region28: #{tpu_custom_call.1} parent=11 // pred_fallthru
          _
      $region12: #{tpu_custom_call.1} parent=5 // pred_fallthru
        _
      %p210 = scmp.lt.s32.totalorder %s19, 2
      // Predicated region
      $region29: #{tpu_custom_call.1} parent=5 // pred_check
        %p211 = pneg %p210
      $region30: #{tpu_custom_call.1} parent=5 // pred_check_branch
        %213 = sbr.rel (%p211) target = $region32
      $region31: #{tpu_custom_call.1} parent=5 // pred_region
        // Predicated region
        $region33: #{tpu_custom_call.1} parent=31 // pred_check
          %p214 = pneg %p39
        $region34: #{tpu_custom_call.1} parent=31 // pred_check_branch
          %216 = sbr.rel (%p214) target = $region36
        $region35: #{tpu_custom_call.1} parent=31 // pred_region
          %s217 = sand.u32 %s29, 1
          %s218 = scalar_lea.sflag [#allocation3], %s217
          %s219 = sand.u32 %s29, 1
          %s220 = smul.addr %s219, 16
          %s221 = scalar_lea.vmem [#allocation2], %s220
          %s222 = smul.u32 4, %s19
          %s224 = ssub.s32 256, 256
          %225 = vsyncadd %s218, %s224
          %s226 = smul.addr %s222, 64
          %s227 = scalar_lea.hbm %s0, %s226
          %s228 = sshll.u32 %s221, 4
          %s229 = int_to_ptr.vmem [resolvable:$true] %s228
          %234 = dma.hbm_to_vmem [thread:$0]  %s227, 256, %s229, %s218, 64, 64, 4
        $region36: #{tpu_custom_call.1} parent=31 // pred_fallthru
          _
      $region32: #{tpu_custom_call.1} parent=5 // pred_fallthru
        _
      %p235 = scmp.le.s32.totalorder 1, %s19
      %p236 = scmp.lt.s32.totalorder %s19, 3
      %p237 = pnand %p235, %p236
      %p238 = pneg %p237
      // Predicated region
      $region37: #{tpu_custom_call.1} parent=5 // pred_check
        _
      $region38: #{tpu_custom_call.1} parent=5 // pred_check_branch
        %240 = sbr.rel (%p237) target = $region40
      $region39: #{tpu_custom_call.1} parent=5 // pred_region
        %s241 = ssub.s32 %s19, 1
        %s242 = sand.u32 %s32, 1
        %s243 = scalar_lea.sflag [#allocation3], %s242
        %s244 = sand.u32 %s32, 1
        %s245 = smul.addr %s244, 16
        %s246 = scalar_lea.vmem [#allocation2], %s245
        // Predicated region
        $region41: #{tpu_custom_call.1} parent=39 // pred_check
          %p247 = pneg %p45
        $region42: #{tpu_custom_call.1} parent=39 // pred_check_branch
          %249 = sbr.rel (%p247) target = $region44
        $region43: #{tpu_custom_call.1} parent=39 // pred_region
          %250 = dma.done %s243, 256
        $region44: #{tpu_custom_call.1} parent=39 // pred_fallthru
          _
        // Predicated region
        $region45: #{tpu_custom_call.1} parent=39 // pred_check
          %p251 = pneg %p66
        $region46: #{tpu_custom_call.1} parent=39 // pred_check_branch
          %253 = sbr.rel (%p251) target = $region48
        $region47: #{tpu_custom_call.1} parent=39 // pred_region
          %254 = dma.done [#allocation6], 2048
        $region48: #{tpu_custom_call.1} parent=39 // pred_fallthru
          _
        // Predicated region
        $region49: #{tpu_custom_call.1} parent=39 // pred_check
          %p255 = pneg %p87
        $region50: #{tpu_custom_call.1} parent=39 // pred_check_branch
          %257 = sbr.rel (%p255) target = $region52
        $region51: #{tpu_custom_call.1} parent=39 // pred_region
          %258 = dma.done [#allocation6], 128
        $region52: #{tpu_custom_call.1} parent=39 // pred_fallthru
          _
        // Predicated region
        $region53: #{tpu_custom_call.1} parent=39 // pred_check
          %p259 = pneg %p108
        $region54: #{tpu_custom_call.1} parent=39 // pred_check_branch
          %261 = sbr.rel (%p259) target = $region56
        $region55: #{tpu_custom_call.1} parent=39 // pred_region
          %262 = dma.done [#allocation9], 2048
        $region56: #{tpu_custom_call.1} parent=39 // pred_fallthru
          _
        %s263 = sand.u32 %s32, 1
        %s264 = scalar_lea.sflag [#allocation3], %s263
        %s265 = sand.u32 %s32, 1
        %s266 = smul.addr %s265, 16
        %s267 = scalar_lea.vmem [#allocation2], %s266
        %p268 = pneg %p45
        %p269 = pneg %p42
        %p270 = pneg %p66
        %p271 = pneg %p63
        %p272 = pneg %p87
        %p273 = pneg %p84
        %p274 = pneg %p108
        %p275 = pneg %p105
        %p276 = pneg %p129
        %p277 = pneg %p126
        %p278 = pneg %p155
        %p279 = pneg %p152
        %s280 = sand.u32 %s142, 1
        %s281 = scalar_lea.sflag [#allocation4], %s280
        %s282 = sand.u32 %s142, 1
        %s283 = smul.addr %s282, 32
        %s284 = scalar_lea.vmem [#allocation10], %s283
        %s285 = smul.u32 4, %s24
        %s286 = smul.u32 4, %s24
        %v288 = vld [vmem:[%s246] sm:$0xf]
        %v289 = vld [vmem:[%s246 + $0x4] sm:$0xf]
        %v290 = vld [vmem:[%s246 + $0x8] sm:$0xf]
        %v291 = vld [vmem:[%s246 + $0xc] sm:$0xf]
        %v292 = vld [vmem:[#allocation5] sm:$0xff]
        %v293 = vld [vmem:[#allocation5 + $0x8] sm:$0xff]
        %v294 = vld [vmem:[#allocation5 + $0x10] sm:$0xff]
        %v295 = vld [vmem:[#allocation5 + $0x18] sm:$0xff]
        %v296 = vld [vmem:[#allocation5 + $0x20] sm:$0xff]
        %v297 = vld [vmem:[#allocation5 + $0x28] sm:$0xff]
        %v298 = vld [vmem:[#allocation5 + $0x30] sm:$0xff]
        %v299 = vld [vmem:[#allocation5 + $0x38] sm:$0xff]
        %v300 = vld [vmem:[#allocation5 + $0x40] sm:$0xff]
        %v301 = vld [vmem:[#allocation5 + $0x48] sm:$0xff]
        %v302 = vld [vmem:[#allocation5 + $0x50] sm:$0xff]
        %v303 = vld [vmem:[#allocation5 + $0x58] sm:$0xff]
        %v304 = vld [vmem:[#allocation5 + $0x60] sm:$0xff]
        %v305 = vld [vmem:[#allocation5 + $0x68] sm:$0xff]
        %v306 = vld [vmem:[#allocation5 + $0x70] sm:$0xff]
        %v307 = vld [vmem:[#allocation5 + $0x78] sm:$0xff]
        %v308 = vld [vmem:[#allocation7] ss:$4 sm:$0x3]
        %v310 = vlaneseq
        %v311 = vshrl.u32 %v310, 7
        %v312 = vsub.s32 0, %v311
        %v313 = vrot.slane %v308, %v312
        %v314 = vlaneseq
        %v315 = vshrl.u32 %v314, 7
        %v316 = vsub.s32 1, %v315
        %v317 = vrot.slane %v308, %v316
        %v324 = vunpack.c.l.b16 %v288
        %v325 = vunpack.c.l.b16 %v289
        %v326 = vunpack.c.l.b16 %v290
        %v327 = vunpack.c.l.b16 %v291
        %v328 = vpack.c.b16 %v325, %v324
        %v329 = vpack.c.b16 %v327, %v326
        %v348 = vunpack.c.l.b16 %v292
        %v349 = vunpack.c.h.b16 %v292
        %v350 = vunpack.c.l.b16 %v293
        %v351 = vunpack.c.h.b16 %v293
        %v352 = vunpack.c.l.b16 %v294
        %v353 = vunpack.c.h.b16 %v294
        %v354 = vunpack.c.l.b16 %v295
        %v355 = vunpack.c.h.b16 %v295
        %v356 = vunpack.c.l.b16 %v296
        %v357 = vunpack.c.h.b16 %v296
        %v358 = vunpack.c.l.b16 %v297
        %v359 = vunpack.c.h.b16 %v297
        %v360 = vunpack.c.l.b16 %v298
        %v361 = vunpack.c.h.b16 %v298
        %v362 = vunpack.c.l.b16 %v299
        %v363 = vunpack.c.h.b16 %v299
        %v364 = vunpack.c.l.b16 %v300
        %v365 = vunpack.c.h.b16 %v300
        %v366 = vunpack.c.l.b16 %v301
        %v367 = vunpack.c.h.b16 %v301
        %v368 = vunpack.c.l.b16 %v302
        %v369 = vunpack.c.h.b16 %v302
        %v370 = vunpack.c.l.b16 %v303
        %v371 = vunpack.c.h.b16 %v303
        %v372 = vunpack.c.l.b16 %v304
        %v373 = vunpack.c.h.b16 %v304
        %v374 = vunpack.c.l.b16 %v305
        %v375 = vunpack.c.h.b16 %v305
        %v376 = vunpack.c.l.b16 %v306
        %v377 = vunpack.c.h.b16 %v306
        %v378 = vunpack.c.l.b16 %v307
        %v379 = vunpack.c.h.b16 %v307
        %v380 = vpack.c.b16 %v350, %v348
        %v381 = vpack.c.b16 %v351, %v349
        %v382 = vpack.c.b16 %v354, %v352
        %v383 = vpack.c.b16 %v355, %v353
        %v384 = vpack.c.b16 %v358, %v356
        %v385 = vpack.c.b16 %v359, %v357
        %v386 = vpack.c.b16 %v362, %v360
        %v387 = vpack.c.b16 %v363, %v361
        %v388 = vpack.c.b16 %v366, %v364
        %v389 = vpack.c.b16 %v367, %v365
        %v390 = vpack.c.b16 %v370, %v368
        %v391 = vpack.c.b16 %v371, %v369
        %v392 = vpack.c.b16 %v374, %v372
        %v393 = vpack.c.b16 %v375, %v373
        %v394 = vpack.c.b16 %v378, %v376
        %v395 = vpack.c.b16 %v379, %v377
        %412 = vmatprep.subr.bf16.mxu0 %v395
        %413 = vmatpush1.bf16.msra.mxu0 %v394
        %414 = vmatprep.subr.bf16.mxu0 %v393
        %415 = vmatpush1.bf16.msra.mxu0 %v392
        %416 = vmatprep.subr.bf16.mxu0 %v391
        %417 = vmatpush1.bf16.msra.mxu0 %v390
        %418 = vmatprep.subr.bf16.mxu0 %v389
        %419 = vmatpush1.bf16.msra.mxu0 %v388
        %420 = vmatprep.subr.bf16.mxu0 %v387
        %421 = vmatpush1.bf16.msra.mxu0 %v386
        %422 = vmatprep.subr.bf16.mxu0 %v385
        %423 = vmatpush1.bf16.msra.mxu0 %v384
        %424 = vmatprep.subr.bf16.mxu0 %v383
        %425 = vmatpush1.bf16.msra.mxu0 %v382
        %426 = vmatprep.subr.bf16.mxu0 %v381
        %427 = vmatpush1.bf16.msra.mxu0 %v380
        %428 = vmatprep.subr.bf16.mxu0 0
        %429 = vmatpush2.bf16.msra.mxu0 0
        %430 = vmatprep.subr.bf16.mxu0 0
        %431 = vmatpush2.bf16.msra.mxu0 0
        %432 = vmatprep.subr.bf16.mxu0 0
        %433 = vmatpush2.bf16.msra.mxu0 0
        %434 = vmatprep.subr.bf16.mxu0 0
        %435 = vmatpush2.bf16.msra.mxu0 0
        %436 = vmatprep.subr.bf16.mxu0 0
        %437 = vmatpush2.bf16.msra.mxu0 0
        %438 = vmatprep.subr.bf16.mxu0 0
        %439 = vmatpush2.bf16.msra.mxu0 0
        %440 = vmatprep.subr.bf16.mxu0 0
        %441 = vmatpush2.bf16.msra.mxu0 0
        %442 = vmatprep.subr.bf16.mxu0 0
        %443 = vmatpush2.bf16.msra.mxu0 0
        %444 = vmatprep.mubr.bf16.mxu0 0
        %445 = vmatmul.mubr.bf16.gmra.mxu0 %v328
        %v446 = vpop.f32.mrf.mxu0
        %v447 = vadd.f32 %v313, %v446
        %v448 = vpop.f32.mrf.mxu0
        %v449 = vadd.f32 %v317, %v448
        %v450 = vpop.f32.mrf.mxu0
        %v451 = vadd.f32 %v313, %v450
        %v452 = vpop.f32.mrf.mxu0
        %v453 = vadd.f32 %v317, %v452
        %454 = vmatprep.mubr.bf16.mxu0 0
        %455 = vmatmul.mubr.bf16.gmra.mxu0 %v329
        %v456 = vpop.f32.mrf.mxu0
        %v457 = vadd.f32 %v313, %v456
        %v458 = vpop.f32.mrf.mxu0
        %v459 = vadd.f32 %v317, %v458
        %v460 = vpop.f32.mrf.mxu0
        %v461 = vadd.f32 %v313, %v460
        %v462 = vpop.f32.mrf.mxu0
        %v463 = vadd.f32 %v317, %v462
        %464 = vdwg.mxu0
        %v465 = vmax.f32 %v447, 0.0
        %v466 = vmax.f32 %v449, 0.0
        %v467 = vmax.f32 %v451, 0.0
        %v468 = vmax.f32 %v453, 0.0
        %v469 = vmax.f32 %v457, 0.0
        %v470 = vmax.f32 %v459, 0.0
        %v471 = vmax.f32 %v461, 0.0
        %v472 = vmax.f32 %v463, 0.0
        %s473 = scalar_lea.vmem [#allocation7], 1
        %v474 = vld [vmem:[%s473] ss:$4 sm:$0x3]
        %s475 = scalar_lea.vmem [#allocation7], 2
        %v476 = vld [vmem:[%s475] ss:$4 sm:$0x3]
        %v477 = vadd.f32 %v465, %v466
        %478 = vadd.xlane.f32.xlu0 %v477
        %v479 = vpop.xlane.xlu0 %478
        %v480 = vadd.f32 %v467, %v468
        %481 = vadd.xlane.f32.xlu0 %v480
        %v482 = vpop.xlane.xlu0 %481
        %v483 = vadd.f32 %v469, %v470
        %484 = vadd.xlane.f32.xlu0 %v483
        %v485 = vpop.xlane.xlu0 %484
        %v486 = vadd.f32 %v471, %v472
        %487 = vadd.xlane.f32.xlu0 %v486
        %v488 = vpop.xlane.xlu0 %487
        %v489 = vrcp.pop 256.0
        %v490 = vmul.f32 %v479, %v489
        %v491 = vmul.f32 %v482, %v489
        %v492 = vmul.f32 %v485, %v489
        %v493 = vmul.f32 %v488, %v489
        %v494 = vsub.f32 %v465, %v490
        %v495 = vsub.f32 %v466, %v490
        %v496 = vsub.f32 %v467, %v491
        %v497 = vsub.f32 %v468, %v491
        %v498 = vsub.f32 %v469, %v492
        %v499 = vsub.f32 %v470, %v492
        %v500 = vsub.f32 %v471, %v493
        %v501 = vsub.f32 %v472, %v493
        %v502 = vmul.f32 %v494, %v494
        %v503 = vmul.f32 %v495, %v495
        %v504 = vmul.f32 %v496, %v496
        %v505 = vmul.f32 %v497, %v497
        %v506 = vmul.f32 %v498, %v498
        %v507 = vmul.f32 %v499, %v499
        %v508 = vmul.f32 %v500, %v500
        %v509 = vmul.f32 %v501, %v501
        %v510 = vadd.f32 %v502, %v503
        %511 = vadd.xlane.f32.xlu0 %v510
        %v512 = vpop.xlane.xlu0 %511
        %v513 = vadd.f32 %v504, %v505
        %514 = vadd.xlane.f32.xlu0 %v513
        %v515 = vpop.xlane.xlu0 %514
        %v516 = vadd.f32 %v506, %v507
        %517 = vadd.xlane.f32.xlu0 %v516
        %v518 = vpop.xlane.xlu0 %517
        %v519 = vadd.f32 %v508, %v509
        %520 = vadd.xlane.f32.xlu0 %v519
        %v521 = vpop.xlane.xlu0 %520
        %v522 = vmul.f32 %v512, %v489
        %v523 = vmul.f32 %v515, %v489
        %v524 = vmul.f32 %v518, %v489
        %v525 = vmul.f32 %v521, %v489
        %v526 = vadd.f32 %v522, 1e-05
        %v527 = vadd.f32 %v523, 1e-05
        %v528 = vadd.f32 %v524, 1e-05
        %v529 = vadd.f32 %v525, 1e-05
        %v530 = vrsqrt.pop %v526
        %v531 = vrsqrt.pop %v527
        %v532 = vrsqrt.pop %v528
        %v533 = vrsqrt.pop %v529
        %v534 = vmul.f32 %v494, %v530
        %v535 = vmul.f32 %v495, %v530
        %v536 = vmul.f32 %v496, %v531
        %v537 = vmul.f32 %v497, %v531
        %v538 = vmul.f32 %v498, %v532
        %v539 = vmul.f32 %v499, %v532
        %v540 = vmul.f32 %v500, %v533
        %v541 = vmul.f32 %v501, %v533
        %v543 = vlaneseq
        %v544 = vshrl.u32 %v543, 7
        %v545 = vsub.s32 0, %v544
        %v546 = vrot.slane %v474, %v545
        %v547 = vlaneseq
        %v548 = vshrl.u32 %v547, 7
        %v549 = vsub.s32 1, %v548
        %v550 = vrot.slane %v474, %v549
        %v553 = vmul.f32 %v534, %v546
        %v554 = vmul.f32 %v535, %v550
        %v555 = vmul.f32 %v536, %v546
        %v556 = vmul.f32 %v537, %v550
        %v557 = vmul.f32 %v538, %v546
        %v558 = vmul.f32 %v539, %v550
        %v559 = vmul.f32 %v540, %v546
        %v560 = vmul.f32 %v541, %v550
        %v562 = vlaneseq
        %v563 = vshrl.u32 %v562, 7
        %v564 = vsub.s32 0, %v563
        %v565 = vrot.slane %v476, %v564
        %v566 = vlaneseq
        %v567 = vshrl.u32 %v566, 7
        %v568 = vsub.s32 1, %v567
        %v569 = vrot.slane %v476, %v568
        %v572 = vadd.f32 %v553, %v565
        %v573 = vadd.f32 %v554, %v569
        %v574 = vadd.f32 %v555, %v565
        %v575 = vadd.f32 %v556, %v569
        %v576 = vadd.f32 %v557, %v565
        %v577 = vadd.f32 %v558, %v569
        %v578 = vadd.f32 %v559, %v565
        %v579 = vadd.f32 %v560, %v569
        %v580 = vpack.c.bf16 %v574, %v572
        %v581 = vpack.c.bf16 %v575, %v573
        %v582 = vpack.c.bf16 %v578, %v576
        %v583 = vpack.c.bf16 %v579, %v577
        %v584 = vld [vmem:[#allocation8] sm:$0xf]
        %v585 = vld [vmem:[#allocation8 + $0x4] sm:$0xf]
        %v586 = vld [vmem:[#allocation8 + $0x8] sm:$0xf]
        %v587 = vld [vmem:[#allocation8 + $0xc] sm:$0xf]
        %v588 = vld [vmem:[#allocation8 + $0x10] sm:$0xf]
        %v589 = vld [vmem:[#allocation8 + $0x14] sm:$0xf]
        %v590 = vld [vmem:[#allocation8 + $0x18] sm:$0xf]
        %v591 = vld [vmem:[#allocation8 + $0x1c] sm:$0xf]
        %v592 = vld [vmem:[#allocation8 + $0x20] sm:$0xf]
        %v593 = vld [vmem:[#allocation8 + $0x24] sm:$0xf]
        %v594 = vld [vmem:[#allocation8 + $0x28] sm:$0xf]
        %v595 = vld [vmem:[#allocation8 + $0x2c] sm:$0xf]
        %v596 = vld [vmem:[#allocation8 + $0x30] sm:$0xf]
        %v597 = vld [vmem:[#allocation8 + $0x34] sm:$0xf]
        %v598 = vld [vmem:[#allocation8 + $0x38] sm:$0xf]
        %v599 = vld [vmem:[#allocation8 + $0x3c] sm:$0xf]
        %v600 = vld [vmem:[#allocation8 + $0x40] sm:$0xf]
        %v601 = vld [vmem:[#allocation8 + $0x44] sm:$0xf]
        %v602 = vld [vmem:[#allocation8 + $0x48] sm:$0xf]
        %v603 = vld [vmem:[#allocation8 + $0x4c] sm:$0xf]
        %v604 = vld [vmem:[#allocation8 + $0x50] sm:$0xf]
        %v605 = vld [vmem:[#allocation8 + $0x54] sm:$0xf]
        %v606 = vld [vmem:[#allocation8 + $0x58] sm:$0xf]
        %v607 = vld [vmem:[#allocation8 + $0x5c] sm:$0xf]
        %v608 = vld [vmem:[#allocation8 + $0x60] sm:$0xf]
        %v609 = vld [vmem:[#allocation8 + $0x64] sm:$0xf]
        %v610 = vld [vmem:[#allocation8 + $0x68] sm:$0xf]
        %v611 = vld [vmem:[#allocation8 + $0x6c] sm:$0xf]
        %v612 = vld [vmem:[#allocation8 + $0x70] sm:$0xf]
        %v613 = vld [vmem:[#allocation8 + $0x74] sm:$0xf]
        %v614 = vld [vmem:[#allocation8 + $0x78] sm:$0xf]
        %v615 = vld [vmem:[#allocation8 + $0x7c] sm:$0xf]
        %v616 = vld [vmem:[%s4] sm:$0x1]
        %v617 = vlaneseq
        %v618 = vshrl.u32 %v617, 7
        %v619 = vsub.s32 0, %v618
        %v620 = vrot.slane %v616, %v619
        %v653 = vunpack.c.l.b16 %v584
        %v654 = vunpack.c.l.b16 %v585
        %v655 = vunpack.c.l.b16 %v586
        %v656 = vunpack.c.l.b16 %v587
        %v657 = vunpack.c.l.b16 %v588
        %v658 = vunpack.c.l.b16 %v589
        %v659 = vunpack.c.l.b16 %v590
        %v660 = vunpack.c.l.b16 %v591
        %v661 = vunpack.c.l.b16 %v592
        %v662 = vunpack.c.l.b16 %v593
        %v663 = vunpack.c.l.b16 %v594
        %v664 = vunpack.c.l.b16 %v595
        %v665 = vunpack.c.l.b16 %v596
        %v666 = vunpack.c.l.b16 %v597
        %v667 = vunpack.c.l.b16 %v598
        %v668 = vunpack.c.l.b16 %v599
        %v669 = vunpack.c.l.b16 %v600
        %v670 = vunpack.c.l.b16 %v601
        %v671 = vunpack.c.l.b16 %v602
        %v672 = vunpack.c.l.b16 %v603
        %v673 = vunpack.c.l.b16 %v604
        %v674 = vunpack.c.l.b16 %v605
        %v675 = vunpack.c.l.b16 %v606
        %v676 = vunpack.c.l.b16 %v607
        %v677 = vunpack.c.l.b16 %v608
        %v678 = vunpack.c.l.b16 %v609
        %v679 = vunpack.c.l.b16 %v610
        %v680 = vunpack.c.l.b16 %v611
        %v681 = vunpack.c.l.b16 %v612
        %v682 = vunpack.c.l.b16 %v613
        %v683 = vunpack.c.l.b16 %v614
        %v684 = vunpack.c.l.b16 %v615
        %v685 = vpack.c.b16 %v654, %v653
        %v686 = vpack.c.b16 %v656, %v655
        %v687 = vpack.c.b16 %v658, %v657
        %v688 = vpack.c.b16 %v660, %v659
        %v689 = vpack.c.b16 %v662, %v661
        %v690 = vpack.c.b16 %v664, %v663
        %v691 = vpack.c.b16 %v666, %v665
        %v692 = vpack.c.b16 %v668, %v667
        %v693 = vpack.c.b16 %v670, %v669
        %v694 = vpack.c.b16 %v672, %v671
        %v695 = vpack.c.b16 %v674, %v673
        %v696 = vpack.c.b16 %v676, %v675
        %v697 = vpack.c.b16 %v678, %v677
        %v698 = vpack.c.b16 %v680, %v679
        %v699 = vpack.c.b16 %v682, %v681
        %v700 = vpack.c.b16 %v684, %v683
        %717 = vmatprep.subr.bf16.mxu0 0
        %718 = vmatpush1.bf16.msra.mxu0 %v692
        %719 = vmatprep.subr.bf16.mxu0 0
        %720 = vmatpush1.bf16.msra.mxu0 %v691
        %721 = vmatprep.subr.bf16.mxu0 0
        %722 = vmatpush1.bf16.msra.mxu0 %v690
        %723 = vmatprep.subr.bf16.mxu0 0
        %724 = vmatpush1.bf16.msra.mxu0 %v689
        %725 = vmatprep.subr.bf16.mxu0 0
        %726 = vmatpush1.bf16.msra.mxu0 %v688
        %727 = vmatprep.subr.bf16.mxu0 0
        %728 = vmatpush1.bf16.msra.mxu0 %v687
        %729 = vmatprep.subr.bf16.mxu0 0
        %730 = vmatpush1.bf16.msra.mxu0 %v686
        %731 = vmatprep.subr.bf16.mxu0 0
        %732 = vmatpush1.bf16.msra.mxu0 %v685
        %733 = vmatprep.subr.bf16.mxu0 0
        %734 = vmatpush2.bf16.msra.mxu0 %v700
        %735 = vmatprep.subr.bf16.mxu0 0
        %736 = vmatpush2.bf16.msra.mxu0 %v699
        %737 = vmatprep.subr.bf16.mxu0 0
        %738 = vmatpush2.bf16.msra.mxu0 %v698
        %739 = vmatprep.subr.bf16.mxu0 0
        %740 = vmatpush2.bf16.msra.mxu0 %v697
        %741 = vmatprep.subr.bf16.mxu0 0
        %742 = vmatpush2.bf16.msra.mxu0 %v696
        %743 = vmatprep.subr.bf16.mxu0 0
        %744 = vmatpush2.bf16.msra.mxu0 %v695
        %745 = vmatprep.subr.bf16.mxu0 0
        %746 = vmatpush2.bf16.msra.mxu0 %v694
        %747 = vmatprep.subr.bf16.mxu0 0
        %748 = vmatpush2.bf16.msra.mxu0 %v693
        %749 = vmatprep.mubr.bf16.mxu0 %v581
        %750 = vmatmul.mubr.bf16.gmra.mxu0 %v580
        %v751 = vpop.f32.mrf.mxu0
        %v752 = vadd.f32 %v620, %v751
        %v753 = vpop.f32.mrf.mxu0
        %v754 = vpop.f32.mrf.mxu0
        %v755 = vadd.f32 %v620, %v754
        %v756 = vpop.f32.mrf.mxu0
        %757 = vmatprep.mubr.bf16.mxu0 %v583
        %758 = vmatmul.mubr.bf16.gmra.mxu0 %v582
        %v759 = vpop.f32.mrf.mxu0
        %v760 = vadd.f32 %v620, %v759
        %v761 = vpop.f32.mrf.mxu0
        %v762 = vpop.f32.mrf.mxu0
        %v763 = vadd.f32 %v620, %v762
        %v764 = vpop.f32.mrf.mxu0
        %765 = vdwg.mxu0
        %v766 = vld [vmem:[%s4 + $0x1] sm:$0x1]
        %v767 = vld [vmem:[%s4 + $0x2] sm:$0x1]
        %768 = vadd.xlane.f32.xlu0 %v752
        %v769 = vpop.xlane.xlu0 %768
        %770 = vadd.xlane.f32.xlu0 %v755
        %v771 = vpop.xlane.xlu0 %770
        %772 = vadd.xlane.f32.xlu0 %v760
        %v773 = vpop.xlane.xlu0 %772
        %774 = vadd.xlane.f32.xlu0 %v763
        %v775 = vpop.xlane.xlu0 %774
        %v776 = vrcp.pop 128.0
        %v777 = vmul.f32 %v769, %v776
        %v778 = vmul.f32 %v771, %v776
        %v779 = vmul.f32 %v773, %v776
        %v780 = vmul.f32 %v775, %v776
        %v781 = vsub.f32 %v752, %v777
        %v782 = vsub.f32 %v755, %v778
        %v783 = vsub.f32 %v760, %v779
        %v784 = vsub.f32 %v763, %v780
        %v785 = vmul.f32 %v781, %v781
        %v786 = vmul.f32 %v782, %v782
        %v787 = vmul.f32 %v783, %v783
        %v788 = vmul.f32 %v784, %v784
        %789 = vadd.xlane.f32.xlu0 %v785
        %v790 = vpop.xlane.xlu0 %789
        %791 = vadd.xlane.f32.xlu0 %v786
        %v792 = vpop.xlane.xlu0 %791
        %793 = vadd.xlane.f32.xlu0 %v787
        %v794 = vpop.xlane.xlu0 %793
        %795 = vadd.xlane.f32.xlu0 %v788
        %v796 = vpop.xlane.xlu0 %795
        %v797 = vmul.f32 %v790, %v776
        %v798 = vmul.f32 %v792, %v776
        %v799 = vmul.f32 %v794, %v776
        %v800 = vmul.f32 %v796, %v776
        %v801 = vadd.f32 %v797, 1e-05
        %v802 = vadd.f32 %v798, 1e-05
        %v803 = vadd.f32 %v799, 1e-05
        %v804 = vadd.f32 %v800, 1e-05
        %v805 = vrsqrt.pop %v801
        %v806 = vrsqrt.pop %v802
        %v807 = vrsqrt.pop %v803
        %v808 = vrsqrt.pop %v804
        %v809 = vmul.f32 %v781, %v805
        %v810 = vmul.f32 %v782, %v806
        %v811 = vmul.f32 %v783, %v807
        %v812 = vmul.f32 %v784, %v808
        %v813 = vlaneseq
        %v814 = vshrl.u32 %v813, 7
        %v815 = vsub.s32 0, %v814
        %v816 = vrot.slane %v766, %v815
        %v817 = vmul.f32 %v809, %v816
        %v818 = vmul.f32 %v810, %v816
        %v819 = vmul.f32 %v811, %v816
        %v820 = vmul.f32 %v812, %v816
        %v821 = vlaneseq
        %v822 = vshrl.u32 %v821, 7
        %v823 = vsub.s32 0, %v822
        %v824 = vrot.slane %v767, %v823
        %v825 = vadd.f32 %v817, %v824
        %v826 = vadd.f32 %v818, %v824
        %v827 = vadd.f32 %v819, %v824
        %v828 = vadd.f32 %v820, %v824
        %829 = vst [vmem:[%s284] sm:$0xff] %v825
        %830 = vst [vmem:[%s284 + $0x8] sm:$0xff] %v826
        %831 = vst [vmem:[%s284 + $0x10] sm:$0xff] %v827
        %832 = vst [vmem:[%s284 + $0x18] sm:$0xff] %v828
        %s833 = sand.u32 %s142, 1
        %s834 = scalar_lea.sflag [#allocation4], %s833
        %s835 = sand.u32 %s142, 1
        %s836 = smul.addr %s835, 32
        %s837 = scalar_lea.vmem [#allocation10], %s836
        // Predicated region
        $region57: #{tpu_custom_call.1} parent=39 // pred_check
          %p838 = pneg %p152
        $region58: #{tpu_custom_call.1} parent=39 // pred_check_branch
          %840 = sbr.rel (%p838) target = $region60
        $region59: #{tpu_custom_call.1} parent=39 // pred_region
          %s841 = smul.u32 4, %s24
          %s843 = ssub.s32 512, 512
          %844 = vsyncadd %s834, %s843
          %s845 = smul.addr %s841, 128
          %s846 = scalar_lea.hbm %s5, %s845
          %s847 = sshll.u32 %s837, 4
          %s848 = int_to_ptr.vmem [resolvable:$true] %s847
          %853 = dma.vmem_to_hbm [thread:$0]  %s848, 512, %s846, %s834, 128, 128, 8
        $region60: #{tpu_custom_call.1} parent=39 // pred_fallthru
          _
      $region40: #{tpu_custom_call.1} parent=5 // pred_fallthru
        _
      %p854 = scmp.le.s32.totalorder 2, %s19
      // Predicated region
      $region61: #{tpu_custom_call.1} parent=5 // pred_check
        %p855 = pneg %p854
      $region62: #{tpu_custom_call.1} parent=5 // pred_check_branch
        %857 = sbr.rel (%p855) target = $region64
      $region63: #{tpu_custom_call.1} parent=5 // pred_region
        %s858 = ssub.s32 %s19, 2
        // Predicated region
        $region65: #{tpu_custom_call.1} parent=63 // pred_check
          %p859 = pneg %p158
        $region66: #{tpu_custom_call.1} parent=63 // pred_check_branch
          %861 = sbr.rel (%p859) target = $region68
        $region67: #{tpu_custom_call.1} parent=63 // pred_region
          %s862 = sand.u32 %s143, 1
          %s863 = scalar_lea.sflag [#allocation4], %s862
          %s864 = sand.u32 %s143, 1
          %s865 = smul.addr %s864, 32
          %s866 = scalar_lea.vmem [#allocation10], %s865
          %867 = dma.done %s863, 512
        $region68: #{tpu_custom_call.1} parent=63 // pred_fallthru
          _
      $region64: #{tpu_custom_call.1} parent=5 // pred_fallthru
        _
    $region6: #{tpu_custom_call.1} parent=1 // loop_footer
      %s23 = sadd.s32 1, %s19
    $region7: #{tpu_custom_call.1} parent=1 // loop_footer_branch
      %18 = sbr.rel target = $region3
    $region8: #{tpu_custom_call.1} parent=1 // loop_exit
      _
    %868 = vsyncpa [#allocation3], 1
    %s869 = scalar_lea.sflag [#allocation3], 1
    %870 = vsyncpa %s869, 1
    %871 = vsyncpa [#allocation6], 1
    %872 = vsyncpa [#allocation9], 1
    %873 = vsyncpa [#allocation4], 1
    %s874 = scalar_lea.sflag [#allocation4], 1
    %875 = vsyncpa %s874, 1

</llo_original>
